<compile_context>
chip_gen: v5e
topology: v5e:2x2
jax: 0.10.0
libtpu: 0.0.40
codegen_flags: <defaults>
</compile_context>

<pallas_src>
import functools

import jax
import jax.numpy as jnp
from jax import lax
from jax.experimental import pallas as pl
from jax.experimental.pallas import tpu as pltpu


def _custom_loss_kernel(pred_ref, target_ref, out_ref, acc_ref, *,
                        tn, blocks_per_part, n):
    p = pl.program_id(0)          # partition (megacore-shardable on v7x)
    j = pl.program_id(1)          # reduction step within the partition
    nj = pl.num_programs(1)

    @pl.when(j == 0)
    def _():
        acc_ref[...] = jnp.zeros_like(acc_ref)

    # Rows of this block that correspond to real slices (tail block may be
    # partial; every block contains >= 1 valid row by construction).
    block_start = (p * blocks_per_part + j) * tn
    rows_valid = jnp.minimum(tn, n - block_start)

    def body(i, carry):
        # Cast to f32 BEFORE subtracting (precision for bf16/fp16 inputs).
        d = pred_ref[i].astype(jnp.float32) - target_ref[i].astype(jnp.float32)
        acc_ref[...] = acc_ref[...] + d * d
        return carry

    lax.fori_loop(0, rows_valid, body, jnp.int32(0))

    @pl.when(j == nj - 1)
    def _():
        # One cross-lane reduce per partition; raw (unnormalized) sum out.
        out_ref[...] = jnp.sum(acc_ref[...]).reshape(1, 1, 1)


def custom_loss(pred, target, recloss, *, target_block_bytes=None,
                num_parts=1):
    """pred, target: (N, H, W) any float dtype; recloss: (N,).

    Returns scalar float32 loss = mean(recloss) + mean_i(mean_hw((pred-target)^2)).
    """
    n, h, w = pred.shape
    assert target.shape == pred.shape and recloss.shape[0] == n

    # ---- generation-aware VMEM capacity ----
    try:
        vmem_cap = int(pltpu.get_tpu_info().vmem_capacity_bytes)
    except Exception:
        vmem_cap = 64 << 20        # conservative (v7x per-TC) fallback

    # Bytes of one (pred + target) slice pair in their *native* dtypes.
    per_slice_in = h * w * (jnp.dtype(pred.dtype).itemsize +
                            jnp.dtype(target.dtype).itemsize)
    slice_f32 = h * w * 4

    # ---- block sizing: combined (pred+target) bytes per grid step ----
    if target_block_bytes is None:
        # 2x double-buffering of the combined block + ~16 MiB for the f32
        # accumulator / per-slice temporaries / compiler scratch.
        target_block_bytes = (min(vmem_cap, 128 << 20) - (16 << 20)) // 2
        target_block_bytes = int(min(max(target_block_bytes, 2 << 20), 48 << 20))

    tn = max(1, min(n, target_block_bytes // per_slice_in))
    n_blocks = -(-n // tn)                         # cdiv: masked tail, no TN search

    # ---- optional partition axis (only if it splits the blocks evenly) ----
    parts = num_parts if (num_parts > 1 and n_blocks >= num_parts
                          and n_blocks % num_parts == 0) else 1
    blocks_per_part = n_blocks // parts

    block_in_bytes = tn * per_slice_in
    vmem_limit = 2 * block_in_bytes + 4 * slice_f32 + (8 << 20)
    vmem_limit = int(max(16 << 20, min(vmem_limit, vmem_cap - (4 << 20))))

    kernel = functools.partial(_custom_loss_kernel,
                               tn=tn, blocks_per_part=blocks_per_part, n=n)

    partials = pl.pallas_call(
        kernel,
        out_shape=jax.ShapeDtypeStruct((parts, 1, 1), jnp.float32),
        grid=(parts, blocks_per_part),
        in_specs=[
            pl.BlockSpec((tn, h, w),
                         lambda p, j: (p * blocks_per_part + j, 0, 0)),
            pl.BlockSpec((tn, h, w),
                         lambda p, j: (p * blocks_per_part + j, 0, 0)),
        ],
        out_specs=pl.BlockSpec((1, 1, 1), lambda p, j: (p, 0, 0)),
        scratch_shapes=[pltpu.VMEM((h, w), jnp.float32)],
        compiler_params=pltpu.CompilerParams(
            dimension_semantics=("parallel", "arbitrary"),
            vmem_limit_bytes=vmem_limit),
    )(pred, target)

    rec_mean = jnp.mean(recloss.astype(jnp.float32))
    return rec_mean + jnp.sum(partials) / jnp.float32(n * h * w)


def _reference(pred, target, recloss):
    d = pred.astype(jnp.float32) - target.astype(jnp.float32)
    mse_per_slice = jnp.mean(d * d, axis=(1, 2))
    return jnp.mean(recloss.astype(jnp.float32) + mse_per_slice)


if __name__ == "__main__":
    key = jax.random.PRNGKey(0)
    k1, k2, k3 = jax.random.split(key, 3)
    N, H, W = 8, 16, 128
    pred = jax.random.normal(k1, (N, H, W), dtype=jnp.float32)
    target = jax.random.normal(k2, (N, H, W), dtype=jnp.float32)
    recloss = jax.random.normal(k3, (N,), dtype=jnp.float32)
    per_slice_pair_bytes = H * W * 8   # f32 pred + f32 target

    # (1) default tiling: whole array in one block, grid (1, 1).
    ref = _reference(pred, target, recloss)
    loss = custom_loss(pred, target, recloss)
    jax.block_until_ready(loss)
    assert jnp.allclose(loss, ref, rtol=1e-5, atol=1e-5), (loss, ref)

    # (2) forced small blocks (TN=2) + 2-way partition axis: grid (2, 2).
    loss2 = custom_loss(pred, target, recloss,
                        target_block_bytes=2 * per_slice_pair_bytes,
                        num_parts=2)
    jax.block_until_ready(loss2)
    assert jnp.allclose(loss2, ref, rtol=1e-5, atol=1e-5), (loss2, ref)

    # (3) awkward N (7) with TN=2: cdiv grid (1, 4), partial tail block.
    p7, t7, r7 = pred[:7], target[:7], recloss[:7]
    ref7 = _reference(p7, t7, r7)
    loss3 = custom_loss(p7, t7, r7,
                        target_block_bytes=2 * per_slice_pair_bytes)
    jax.block_until_ready(loss3)
    assert jnp.allclose(loss3, ref7, rtol=1e-5, atol=1e-5), (loss3, ref7)

    # (4) native bf16 streaming (cast to f32 inside the kernel).
    pred_bf = pred.astype(jnp.bfloat16)
    target_bf = target.astype(jnp.bfloat16)
    ref_bf = _reference(pred_bf, target_bf, recloss)
    loss4 = custom_loss(pred_bf, target_bf, recloss)
    jax.block_until_ready(loss4)
    assert jnp.allclose(loss4, ref_bf, rtol=1e-5, atol=1e-5), (loss4, ref_bf)

    print("KERNEL_OK")
</pallas_src>

<mosaic_0001>
module attributes {stable_mosaic.version = 11 : i64} {
  func.func @_custom_loss_kernel(%arg0: i32, %arg1: i32, %arg2: memref<8x16x128xf32, #tpu.memory_space<vmem>>, %arg3: memref<8x16x128xf32, #tpu.memory_space<vmem>>, %arg4: memref<1x1x1xf32, #tpu.memory_space<vmem>>, %arg5: memref<16x128xf32, #tpu.memory_space<vmem>>) attributes {dimension_semantics = [#tpu.dimension_semantics<parallel>, #tpu.dimension_semantics<arbitrary>], iteration_bounds = array<i64: 1, 1>, scalar_prefetch = 0 : i64, scratch_operands = 1 : i64, tpu.core_type = #tpu.core_type<tc>, window_params = [{transform_indices = @transform_0, window_bounds = array<i64: 8, 16, 128>}, {transform_indices = @transform_1, window_bounds = array<i64: 8, 16, 128>}, {transform_indices = @transform_2, window_bounds = array<i64: 1, 1, 1>}]} {
    %c0_i32 = arith.constant 0 : i32
    %0 = arith.cmpi eq, %arg1, %c0_i32 : i32
    %1 = arith.extui %0 : i1 to i32
    %c0_i32_0 = arith.constant 0 : i32
    %2 = arith.cmpi ne, %1, %c0_i32_0 : i32
    scf.if %2 {
      %cst = arith.constant 0.000000e+00 : f32
      %13 = vector.broadcast %cst : f32 to vector<16x128xf32>
      %c0 = arith.constant 0 : index
      %c0_8 = arith.constant 0 : index
      %14 = vector.load %arg5[%c0, %c0_8] : memref<16x128xf32, #tpu.memory_space<vmem>>, vector<16x128xf32>
      tpu.vector_store %arg5[%c0, %c0_8], %13 {strides = array<i32>} : memref<16x128xf32, #tpu.memory_space<vmem>>, vector<16x128xf32>,
    } else {
    }
    %c1_i32 = arith.constant 1 : i32
    %3 = arith.muli %arg0, %c1_i32 : i32
    %4 = arith.addi %3, %arg1 : i32
    %c8_i32 = arith.constant 8 : i32
    %5 = arith.muli %4, %c8_i32 : i32
    %c8_i32_1 = arith.constant 8 : i32
    %6 = arith.subi %c8_i32_1, %5 : i32
    %c8_i32_2 = arith.constant 8 : i32
    %7 = arith.minsi %c8_i32_2, %6 : i32
    %c0_i32_3 = arith.constant 0 : i32
    %c0_i32_4 = arith.constant 0 : i32
    %8 = arith.subi %7, %c0_i32_4 : i32
    %9 = arith.addi %c0_i32_4, %8 : i32
    %c1_i32_5 = arith.constant 1 : i32
    scf.for %arg6 = %c0_i32_4 to %9 step %c1_i32_5  : i32 {
      %13 = arith.index_cast %arg6 : i32 to index
      %c0 = arith.constant 0 : index
      %c0_8 = arith.constant 0 : index
      %14 = vector.load %arg2[%13, %c0, %c0_8] : memref<8x16x128xf32, #tpu.memory_space<vmem>>, vector<1x16x128xf32>
      %15 = vector.shape_cast %14 : vector<1x16x128xf32> to vector<16x128xf32>
      %16 = arith.index_cast %arg6 : i32 to index
      %c0_9 = arith.constant 0 : index
      %c0_10 = arith.constant 0 : index
      %17 = vector.load %arg3[%16, %c0_9, %c0_10] : memref<8x16x128xf32, #tpu.memory_space<vmem>>, vector<1x16x128xf32>
      %18 = vector.shape_cast %17 : vector<1x16x128xf32> to vector<16x128xf32>
      %19 = arith.subf %15, %18 : vector<16x128xf32>
      %c0_11 = arith.constant 0 : index
      %c0_12 = arith.constant 0 : index
      %20 = vector.load %arg5[%c0_11, %c0_12] : memref<16x128xf32, #tpu.memory_space<vmem>>, vector<16x128xf32>
      %21 = arith.mulf %19, %19 : vector<16x128xf32>
      %22 = arith.addf %20, %21 : vector<16x128xf32>
      %c0_13 = arith.constant 0 : index
      %c0_14 = arith.constant 0 : index
      %23 = vector.load %arg5[%c0_13, %c0_14] : memref<16x128xf32, #tpu.memory_space<vmem>>, vector<16x128xf32>
      tpu.vector_store %arg5[%c0_13, %c0_14], %22 {strides = array<i32>} : memref<16x128xf32, #tpu.memory_space<vmem>>, vector<16x128xf32>,
    }
    %c0_i32_6 = arith.constant 0 : i32
    %10 = arith.cmpi eq, %arg1, %c0_i32_6 : i32
    %11 = arith.extui %10 : i1 to i32
    %c0_i32_7 = arith.constant 0 : i32
    %12 = arith.cmpi ne, %11, %c0_i32_7 : i32
    scf.if %12 {
      %c0 = arith.constant 0 : index
      %c0_8 = arith.constant 0 : index
      %13 = vector.load %arg5[%c0, %c0_8] : memref<16x128xf32, #tpu.memory_space<vmem>>, vector<16x128xf32>
      %14 = vector.shape_cast %13 : vector<16x128xf32> to vector<1x16x128xf32>
      %cst = arith.constant dense<0.000000e+00> : vector<1xf32>
      %15 = vector.multi_reduction <add>, %14, %cst [1, 2] : vector<1x16x128xf32> to vector<1xf32>
      %16 = vector.shape_cast %15 : vector<1xf32> to vector<1x1x1xf32>
      %17 = vector.extract %16[0, 0, 0] : f32 from vector<1x1x1xf32>
      %18 = vector.broadcast %17 : f32 to vector<1x1x1xf32>
      %c0_9 = arith.constant 0 : index
      %c0_10 = arith.constant 0 : index
      %c0_11 = arith.constant 0 : index
      %19 = vector.load %arg4[%c0_9, %c0_10, %c0_11] : memref<1x1x1xf32, #tpu.memory_space<vmem>>, vector<1x1x1xf32>
      tpu.vector_store %arg4[%c0_9, %c0_10, %c0_11], %18 {strides = array<i32>} : memref<1x1x1xf32, #tpu.memory_space<vmem>>, vector<1x1x1xf32>,
    } else {
    }
    return
  }
  func.func @transform_0(%arg0: i32, %arg1: i32) -> (i32, i32, i32) {
    %c1_i32 = arith.constant 1 : i32
    %0 = arith.muli %arg0, %c1_i32 : i32
    %1 = arith.addi %0, %arg1 : i32
    %c0_i32 = arith.constant 0 : i32
    %c0_i32_0 = arith.constant 0 : i32
    %c0_i32_1 = arith.constant 0 : i32
    return %1, %c0_i32, %c0_i32_0 : i32, i32, i32
  }
  func.func @transform_1(%arg0: i32, %arg1: i32) -> (i32, i32, i32) {
    %c1_i32 = arith.constant 1 : i32
    %0 = arith.muli %arg0, %c1_i32 : i32
    %1 = arith.addi %0, %arg1 : i32
    %c0_i32 = arith.constant 0 : i32
    %c0_i32_0 = arith.constant 0 : i32
    %c0_i32_1 = arith.constant 0 : i32
    return %1, %c0_i32, %c0_i32_0 : i32, i32, i32
  }
  func.func @transform_2(%arg0: i32, %arg1: i32) -> (i32, i32, i32) {
    %c0_i32 = arith.constant 0 : i32
    %c0_i32_0 = arith.constant 0 : i32
    %c0_i32_1 = arith.constant 0 : i32
    return %arg0, %c0_i32, %c0_i32_0 : i32, i32, i32
  }
}

</mosaic_0001>

<llo_original>
// kernel: tpu_custom_call.1
$region0: #{tpu_custom_call.1}
  #allocation0 [shape = 'u32[]', space=smem, size = 0x4, offset = 0x4, fixed_abs, tag = 'smem constant byte address 0x4 - core index']
  #allocation1 [shape = 'u32[72,128]{1,0:T(1,128)}', space=vmem, size = 0x9000, scoped, tag = 'internal scratch']
  #allocation2 [shape = 'f32[16,128]{1,0:T(8,128)}', space=vmem, size = 0x2000, scoped, tag = 'scratch operand']
  %s0 = inlined_call_operand.hbm [shape: f32[8,16,128], index: 0, kind: input, shape index: {}]
  %s1 = inlined_call_operand.hbm [shape: f32[8,16,128], index: 1, kind: input, shape index: {}]
  %s2 = inlined_call_operand.hbm [shape: f32[1,1,1], index: 2, kind: output, shape index: {}]
  %s3 = sld [smem:[#allocation0]]
  $region41: #{tpu_custom_call.1} parent=0
    _
  %s5 = ssub.s32 1, %s3
  %s6 = scalar_select 0, %s5, %s3
  $region1: #{tpu_custom_call.1} parent=0
    #allocation3 [shape = 'u8[65536]{0}', space=vmem, size = 0x10000, scoped, tag = 'input window, operand 0, single buffered']
    #allocation4 [shape = 's32[1]{0}', space=sflag, size = 0x4, scoped, tag = 'scoped memory for tpu_custom_call.1']
    #allocation5 [shape = 's32[1]{0}', space=sflag, size = 0x4, scoped, tag = 'scoped memory for tpu_custom_call.1']
    #allocation6 [shape = 'u8[65536]{0}', space=vmem, size = 0x10000, scoped, tag = 'input window, operand 1, single buffered']
    #allocation7 [shape = 's32[1]{0}', space=sflag, size = 0x4, scoped, tag = 'scoped memory for tpu_custom_call.1']
    #allocation8 [shape = 'u8[512]{0}', space=vmem, size = 0x400, scoped, tag = 'output window, operand 0, single buffered']
    %7 = vsyncpa [#allocation4], 0
    %8 = vsyncpa [#allocation7], 0
    %9 = vsyncpa [#allocation5], 0
    // Predicated region
    $region2: #{tpu_custom_call.1} parent=1 // pred_check
      _
    $region3: #{tpu_custom_call.1} parent=1 // pred_check_branch
      %11 = sbr.rel (0) target = $region5
    $region4: #{tpu_custom_call.1} parent=1 // pred_region
      %s12 = sadd.s32 0, 0
      %s13 = smul.u32 8, %s12
      %15 = vsyncadd [#allocation4], 0
      %s16 = smul.addr %s13, 2
      %s17 = smul.addr %s16, 8
      %s18 = scalar_lea.hbm %s0, %s17
      %s19 = sshll.u32 %s18, 4
      %s20 = int_to_ptr.hbm [resolvable:$true] %s19
      %s21 = sshll.u32 [#allocation3], 4
      %s22 = int_to_ptr.vmem [resolvable:$true] %s21
      %27 = dma.hbm_to_vmem [thread:$0]  %s20, 2048, %s22, [#allocation4], 128, 128, 8
    $region5: #{tpu_custom_call.1} parent=1 // pred_fallthru
      _
    // Predicated region
    $region6: #{tpu_custom_call.1} parent=1 // pred_check
      _
    $region7: #{tpu_custom_call.1} parent=1 // pred_check_branch
      %29 = sbr.rel (0) target = $region9
    $region8: #{tpu_custom_call.1} parent=1 // pred_region
      %s30 = sadd.s32 0, 0
      %s31 = smul.u32 8, %s30
      %33 = vsyncadd [#allocation7], 0
      %s34 = smul.addr %s31, 2
      %s35 = smul.addr %s34, 8
      %s36 = scalar_lea.hbm %s1, %s35
      %s37 = sshll.u32 %s36, 4
      %s38 = int_to_ptr.hbm [resolvable:$true] %s37
      %s39 = sshll.u32 [#allocation6], 4
      %s40 = int_to_ptr.vmem [resolvable:$true] %s39
      %45 = dma.hbm_to_vmem [thread:$0]  %s38, 2048, %s40, [#allocation7], 128, 128, 8
    $region9: #{tpu_custom_call.1} parent=1 // pred_fallthru
      _
    // Predicated region
    $region10: #{tpu_custom_call.1} parent=1 // pred_check
      _
    $region11: #{tpu_custom_call.1} parent=1 // pred_check_branch
      %47 = sbr.rel (0) target = $region13
    $region12: #{tpu_custom_call.1} parent=1 // pred_region
      %49 = dma.done [#allocation4], 2048
    $region13: #{tpu_custom_call.1} parent=1 // pred_fallthru
      _
    // Predicated region
    $region14: #{tpu_custom_call.1} parent=1 // pred_check
      _
    $region15: #{tpu_custom_call.1} parent=1 // pred_check_branch
      %51 = sbr.rel (0) target = $region17
    $region16: #{tpu_custom_call.1} parent=1 // pred_region
      %53 = dma.done [#allocation7], 2048
    $region17: #{tpu_custom_call.1} parent=1 // pred_fallthru
      _
    %s54 = sadd.s32 0, 0
    %s55 = smul.u32 8, %s54
    %s56 = sadd.s32 0, 0
    %s57 = smul.u32 8, %s56
    %p58 = scmp.eq.s32.totalorder 0, 0
    // Predicated region
    $region18: #{tpu_custom_call.1} parent=1 // pred_check
      %p59 = pneg %p58
    $region19: #{tpu_custom_call.1} parent=1 // pred_check_branch
      %61 = sbr.rel (%p59) target = $region21
    $region20: #{tpu_custom_call.1} parent=1 // pred_region
      %62 = vst [vmem:[#allocation2] sm:$0xff] 0.0
      %63 = vst [vmem:[#allocation2 + $0x8] sm:$0xff] 0.0
    $region21: #{tpu_custom_call.1} parent=1 // pred_fallthru
      _
    %s64 = sadd.s32 0, 0
    %s65 = smul.u32 %s64, 8
    %s66 = ssub.s32 8, %s65
    %p67 = scmp.lt.s32.totalorder %s66, 8
    %s68 = scalar_select %p67, %s66, 8
    // While loop
    $region22: #{tpu_custom_call.1} parent=1 // loop_pre_header
      _
    $region23: #{tpu_custom_call.1} parent=1 // loop_header
      %s70 = sphi 0, %s72
      %p71 = scmp.ge.s32.totalorder %s70, %s68
    $region24: #{tpu_custom_call.1} parent=1 // loop_header_branch
      %74 = sbr.rel (%p71) target = $region28
    $region25: #{tpu_custom_call.1} parent=1 // loop_body
      %s75 = smul.u32 %s70, 16
      %s76 = scalar_lea.vmem [#allocation3], %s75
      %v77 = vld [vmem:[%s76] sm:$0xff]
      %v78 = vld [vmem:[%s76 + $0x8] sm:$0xff]
      %s79 = scalar_lea.vmem [#allocation6], %s75
      %v80 = vld [vmem:[%s79] sm:$0xff]
      %v81 = vld [vmem:[%s79 + $0x8] sm:$0xff]
      %v82 = vsub.f32 %v77, %v80
      %v83 = vsub.f32 %v78, %v81
      %v84 = vld [vmem:[#allocation2] sm:$0xff]
      %v85 = vld [vmem:[#allocation2 + $0x8] sm:$0xff]
      %v86 = vmul.f32 %v82, %v82
      %v87 = vmul.f32 %v83, %v83
      %v88 = vadd.f32 %v84, %v86
      %v89 = vadd.f32 %v85, %v87
      %90 = vst [vmem:[#allocation2] sm:$0xff] %v88
      %91 = vst [vmem:[#allocation2 + $0x8] sm:$0xff] %v89
    $region26: #{tpu_custom_call.1} parent=1 // loop_footer
      %s72 = sadd.s32 %s70, 1
    $region27: #{tpu_custom_call.1} parent=1 // loop_footer_branch
      %69 = sbr.rel target = $region23
    $region28: #{tpu_custom_call.1} parent=1 // loop_exit
      _
    // Predicated region
    $region29: #{tpu_custom_call.1} parent=1 // pred_check
      %p92 = pneg %p58
    $region30: #{tpu_custom_call.1} parent=1 // pred_check_branch
      %94 = sbr.rel (%p92) target = $region32
    $region31: #{tpu_custom_call.1} parent=1 // pred_region
      %v95 = vld [vmem:[#allocation2] sm:$0xff]
      %v96 = vld [vmem:[#allocation2 + $0x8] sm:$0xff]
      %v97 = vadd.f32 %v95, %v96
      %98 = vadd.xlane.f32.xlu0 %v97
      %v99 = vpop.xlane.xlu0 %98
      %v100 = vrot.slane %v99, 4
      %v101 = vadd.f32 %v99, %v100
      %v102 = vrot.slane %v101, 2
      %v103 = vadd.f32 %v101, %v102
      %v104 = vrot.slane %v103, 1
      %v105 = vadd.f32 %v103, %v104
      %s106 = vtos %v105
      %v107 = vstv %s106
      %vm108 = vcmask 0
      %109 = vst.msk [vmem:[#allocation8] sm:$0x1] %vm108, %v107
    $region32: #{tpu_custom_call.1} parent=1 // pred_fallthru
      _
    // Predicated region
    $region33: #{tpu_custom_call.1} parent=1 // pred_check
      _
    $region34: #{tpu_custom_call.1} parent=1 // pred_check_branch
      %111 = sbr.rel (0) target = $region36
    $region35: #{tpu_custom_call.1} parent=1 // pred_region
      %113 = vsyncadd [#allocation5], 0
      %s115 = sshll.u32 [#allocation8], 4
      %s116 = int_to_ptr.vmem [resolvable:$true] %s115
      %s117 = sshll.u32 %s2, 4
      %s118 = int_to_ptr.hbm [resolvable:$true] %s117
      %120 = dma.vmem_to_hbm [thread:$0]  %s116, 16, %s118, [#allocation5]
    $region36: #{tpu_custom_call.1} parent=1 // pred_fallthru
      _
    // Predicated region
    $region37: #{tpu_custom_call.1} parent=1 // pred_check
      _
    $region38: #{tpu_custom_call.1} parent=1 // pred_check_branch
      %122 = sbr.rel (0) target = $region40
    $region39: #{tpu_custom_call.1} parent=1 // pred_region
      %124 = dma.done [#allocation5], 16
    $region40: #{tpu_custom_call.1} parent=1 // pred_fallthru
      _
    %125 = vsyncpa [#allocation4], 1
    %126 = vsyncpa [#allocation7], 1
    %127 = vsyncpa [#allocation5], 1

</llo_original>
